<compile_context>
chip_gen: v6e
topology: v6e:2x2x1
jax: 0.10.0
libtpu: 0.0.40
codegen_flags: <defaults>
</compile_context>

<pallas_src>
from functools import partial

import jax
import jax.numpy as jnp
from jax.experimental import pallas as pl
from jax.experimental.pallas import tpu as pltpu


# --------------------------------------------------------------------------
# Kernel: one lane-dense bias-matmul tile   o = x @ w + b
# --------------------------------------------------------------------------
def _linear_bias_kernel(x_ref, w_ref, b_ref, o_ref, *, compute_dtype):
    # x_ref: (TN, C)  w_ref: (C, TDO) compute_dtype  b_ref: (1, TDO) f32
    # o_ref: (TN, TDO)
    x = x_ref[...].astype(compute_dtype)  # no-op if producer already emits bf16
    acc = jnp.dot(x, w_ref[...], preferred_element_type=jnp.float32)
    o_ref[...] = (acc + b_ref[...]).astype(o_ref.dtype)


def _vmem_budget_bytes():
    """Generation-aware VMEM budget: ~75% of physical VMEM (48 MiB fallback)."""
    try:
        cap = pltpu.get_tpu_info().vmem_capacity_bytes
    except Exception:
        cap = 64 * 1024 * 1024  # conservative (v7x-sized) fallback
    return int(cap * 0.75)


def _pick_tiles(rows, C, Dout, x_bytes, w_bytes, out_bytes, budget):
    """Choose (row tile, Dout tile) so tiles fit the VMEM budget."""
    # Dout tile: largest divisor of Dout that is a multiple of 128 (<= 2048);
    # if Dout is not a multiple of 128 the block must span the full dim.
    if Dout % 128 == 0:
        tdo = min(Dout, 2048)
        while Dout % tdo:
            tdo -= 128
    else:
        tdo = Dout

    def fits(tn):
        vm = (C * tdo * w_bytes            # weight tile (single-buffered)
              + tdo * 4                    # bias tile
              + 2 * tn * C * x_bytes       # x double buffer
              + 2 * tn * tdo * out_bytes)  # out double buffer
        return vm <= budget

    tn = 512                               # big tiles amortize per-step overhead
    while tn > 8 and not fits(tn):
        tn //= 2
    tn = max(tn, 8)
    if rows < tn:
        tn = -(-rows // 8) * 8             # round rows up to a multiple of 8
    return tn, tdo


def _linear_bias_pallas(x2, w, b, *, compute_dtype=jnp.bfloat16, out_dtype=None):
    """y = x2 @ w + b   with x2: (R, C), w: (C, Dout) pre-cast, b: (Dout,)."""
    R, C = x2.shape
    Dout = w.shape[1]
    out_dtype = x2.dtype if out_dtype is None else jnp.dtype(out_dtype)

    budget = _vmem_budget_bytes()
    tn, tdo = _pick_tiles(R, C, Dout, x2.dtype.itemsize, w.dtype.itemsize,
                          jnp.dtype(out_dtype).itemsize, budget)

    r_pad = -(-R // tn) * tn
    if r_pad != R:
        x2 = jnp.pad(x2, ((0, r_pad - R), (0, 0)))

    b2 = b.reshape(1, Dout).astype(jnp.float32)
    grid = (r_pad // tn, Dout // tdo)

    cost = pl.CostEstimate(
        flops=2 * R * C * Dout,
        transcendentals=0,
        bytes_accessed=(R * C * x2.dtype.itemsize
                        + C * Dout * w.dtype.itemsize
                        + Dout * 4
                        + R * Dout * jnp.dtype(out_dtype).itemsize),
    )

    def build(single_buffer_weights):
        # Weights / bias have a constant index map along the row axis; the
        # second pipeline buffer is pure VMEM waste -> Buffered(1).
        extra = ({"pipeline_mode": pl.Buffered(1)}
                 if single_buffer_weights else {})
        return pl.pallas_call(
            partial(_linear_bias_kernel, compute_dtype=compute_dtype),
            out_shape=jax.ShapeDtypeStruct((r_pad, Dout), out_dtype),
            grid_spec=pltpu.PrefetchScalarGridSpec(
                num_scalar_prefetch=0,
                grid=grid,
                in_specs=[
                    pl.BlockSpec((tn, C), lambda r, d: (r, 0)),
                    pl.BlockSpec((C, tdo), lambda r, d: (0, d), **extra),
                    pl.BlockSpec((1, tdo), lambda r, d: (0, d), **extra),
                ],
                out_specs=pl.BlockSpec((tn, tdo), lambda r, d: (r, d)),
            ),
            compiler_params=pltpu.CompilerParams(
                dimension_semantics=("parallel", "parallel"),
                vmem_limit_bytes=budget,
            ),
            cost_estimate=cost,
        )

    try:
        y = build(True)(x2, w, b2)
    except Exception:
        # Installed jax rejects pipeline_mode / Buffered(1): fall back to the
        # default double-buffered weights (same numerics, more VMEM).
        y = build(False)(x2, w, b2)

    return y[:R] if r_pad != R else y


# --------------------------------------------------------------------------
# Module wrapper (weight prep hoisted out of the forward path)
# --------------------------------------------------------------------------
def init_linear_projection_params(wq, bq, wkv, bkv, *, compute_dtype=jnp.bfloat16):
    """One-time weight prep. wq/wkv use PyTorch nn.Linear layout (out, in)."""
    return dict(
        # fused [Wq | Wk | Wv] : (C, 3*inner_dim) — self-attention path
        w_qkv=jnp.concatenate([wq.T, wkv.T], axis=1).astype(compute_dtype),
        b_qkv=jnp.concatenate([bq, bkv], axis=0).astype(jnp.float32),
        # separate q / kv — cross-attention path
        w_q=wq.T.astype(compute_dtype),
        b_q=bq.astype(jnp.float32),
        w_kv=wkv.T.astype(compute_dtype),
        b_kv=bkv.astype(jnp.float32),
        inner_dim=int(wq.shape[0]),
        compute_dtype=compute_dtype,
    )


def linear_projection(params, x, heads, attn_kv=None, *, out_dtype=None):
    """Pallas forward of LinearProjection. x: (B, N, C); attn_kv: (N_kv, C) or None."""
    B, N, C = x.shape
    D = params["inner_dim"]
    dh = C // heads
    assert heads * dh == D, "inner_dim must equal heads * (C // heads)"
    cd = params["compute_dtype"]

    x2 = x.reshape(B * N, C)
    if attn_kv is None:
        qkv = _linear_bias_pallas(x2, params["w_qkv"], params["b_qkv"],
                                  compute_dtype=cd, out_dtype=out_dtype)
        # Head split / permute is pure layout; keep it out of the kernel.
        qkv = qkv.reshape(B, N, 3, heads, dh).transpose(2, 0, 3, 1, 4)
        return qkv[0], qkv[1], qkv[2]

    N_kv = attn_kv.shape[0]
    q = _linear_bias_pallas(x2, params["w_q"], params["b_q"],
                            compute_dtype=cd, out_dtype=out_dtype)
    q = q.reshape(B, N, heads, dh).transpose(0, 2, 1, 3)
    # attn_kv is shared across the batch: project once, head-split once, THEN
    # broadcast -> avoids materializing B copies before the layout ops.
    kv = _linear_bias_pallas(attn_kv, params["w_kv"], params["b_kv"],
                             compute_dtype=cd, out_dtype=out_dtype)
    kv = kv.reshape(N_kv, 2, heads, dh).transpose(1, 2, 0, 3)       # (2, H, Nkv, dh)
    kv = jnp.broadcast_to(kv[:, None], (2, B, heads, N_kv, dh))
    return q, kv[0], kv[1]


def linear_projection_reference(x, wq, bq, wkv, bkv, heads, attn_kv=None):
    """Pure-JAX (f32) reference mirroring the PyTorch module exactly."""
    B, N, C = x.shape
    dh = C // heads
    kv_in = x if attn_kv is None else jnp.broadcast_to(attn_kv[None],
                                                       (B,) + attn_kv.shape)
    N_kv = kv_in.shape[1]
    q = jnp.einsum("bnc,dc->bnd", x, wq) + bq
    kv = jnp.einsum("bnc,dc->bnd", kv_in, wkv) + bkv
    q = q.reshape(B, N, 1, heads, dh).transpose(2, 0, 3, 1, 4)[0]
    kv = kv.reshape(B, N_kv, 2, heads, dh).transpose(2, 0, 3, 1, 4)
    return q, kv[0], kv[1]


if __name__ == "__main__":
    # Small shapes consistent with LinearProjection(dim, heads) as used in
    # T2HyDHZ (inner_dim == dim): B=2, N=64, dim=32, heads=8 -> dim_head=4.
    B, N, dim, heads = 2, 64, 32, 8
    dim_head = dim // heads
    inner_dim = dim_head * heads

    key = jax.random.PRNGKey(0)
    kx, kq, kqb, kkv, kkvb, kcr = jax.random.split(key, 6)

    x = jax.random.normal(kx, (B, N, dim), dtype=jnp.float32)
    # PyTorch nn.Linear weight layout: (out_features, in_features)
    wq = jax.random.normal(kq, (inner_dim, dim), dtype=jnp.float32) * 0.1
    bq = jax.random.normal(kqb, (inner_dim,), dtype=jnp.float32) * 0.1
    wkv = jax.random.normal(kkv, (2 * inner_dim, dim), dtype=jnp.float32) * 0.1
    bkv = jax.random.normal(kkvb, (2 * inner_dim,), dtype=jnp.float32) * 0.1

    # One-time weight prep (transpose / fuse / bf16 cast) — not per forward.
    params = init_linear_projection_params(wq, bq, wkv, bkv)

    # --- self-attention path (attn_kv=None) ---
    q, k, v = linear_projection(params, x, heads)
    q, k, v = jax.block_until_ready((q, k, v))
    q_r, k_r, v_r = linear_projection_reference(x, wq, bq, wkv, bkv, heads)
    assert q.shape == (B, heads, N, dim_head)
    assert k.shape == (B, heads, N, dim_head)
    assert v.shape == (B, heads, N, dim_head)
    for a, r in ((q, q_r), (k, k_r), (v, v_r)):
        # bf16 MXU inputs with f32 accumulation vs full-f32 reference
        assert jnp.allclose(a, r, atol=5e-2, rtol=5e-2), float(jnp.abs(a - r).max())

    # --- cross-attention path (shared attn_kv, as in the module) ---
    N_kv = 48
    attn_kv = jax.random.normal(kcr, (N_kv, dim), dtype=jnp.float32)
    q2, k2, v2 = linear_projection(params, x, heads, attn_kv=attn_kv)
    q2, k2, v2 = jax.block_until_ready((q2, k2, v2))
    q2r, k2r, v2r = linear_projection_reference(x, wq, bq, wkv, bkv, heads,
                                                attn_kv=attn_kv)
    assert k2.shape == (B, heads, N_kv, dim_head)
    for a, r in ((q2, q2r), (k2, k2r), (v2, v2r)):
        assert jnp.allclose(a, r, atol=5e-2, rtol=5e-2), float(jnp.abs(a - r).max())

    print("KERNEL_OK")
</pallas_src>

<mosaic_0001>
module attributes {stable_mosaic.version = 11 : i64} {
  func.func @_linear_bias_kernel(%arg0: i32, %arg1: i32, %arg2: memref<128x32xf32, #tpu.memory_space<vmem>>, %arg3: memref<32x96xbf16, #tpu.memory_space<vmem>>, %arg4: memref<1x96xf32, #tpu.memory_space<vmem>>, %arg5: memref<128x96xf32, #tpu.memory_space<vmem>>) attributes {dimension_semantics = [#tpu.dimension_semantics<parallel>, #tpu.dimension_semantics<parallel>], iteration_bounds = array<i64: 1, 1>, scalar_prefetch = 0 : i64, scratch_operands = 0 : i64, tpu.core_type = #tpu.core_type<tc>, window_params = [{transform_indices = @transform_0, window_bounds = array<i64: 128, 32>}, {pipeline_mode = #tpu.pipeline_mode<synchronous>, transform_indices = @transform_1, window_bounds = array<i64: 32, 96>}, {pipeline_mode = #tpu.pipeline_mode<synchronous>, transform_indices = @transform_2, window_bounds = array<i64: 1, 96>}, {transform_indices = @transform_3, window_bounds = array<i64: 128, 96>}]} {
    %c0 = arith.constant 0 : index
    %c0_0 = arith.constant 0 : index
    %0 = vector.load %arg2[%c0, %c0_0] : memref<128x32xf32, #tpu.memory_space<vmem>>, vector<128x32xf32>
    %1 = arith.truncf %0 : vector<128x32xf32> to vector<128x32xbf16>
    %c0_1 = arith.constant 0 : index
    %c0_2 = arith.constant 0 : index
    %2 = vector.load %arg3[%c0_1, %c0_2] : memref<32x96xbf16, #tpu.memory_space<vmem>>, vector<32x96xbf16>
    %cst = arith.constant dense<0.000000e+00> : vector<128x96xf32>
    %3 = tpu.matmul %1, %2, %cst {dimension_numbers = #tpu.dot_dimension_numbers<[1], [0], [0], [1], [0, 0, 1, 1], [], []>} : vector<128x32xbf16>, vector<32x96xbf16>, vector<128x96xf32> -> vector<128x96xf32>
    %c0_3 = arith.constant 0 : index
    %c0_4 = arith.constant 0 : index
    %4 = vector.load %arg4[%c0_3, %c0_4] : memref<1x96xf32, #tpu.memory_space<vmem>>, vector<1x96xf32>
    %5 = vector.broadcast %4 : vector<1x96xf32> to vector<128x96xf32>
    %6 = arith.addf %3, %5 : vector<128x96xf32>
    %c0_5 = arith.constant 0 : index
    %c0_6 = arith.constant 0 : index
    %7 = vector.load %arg5[%c0_5, %c0_6] : memref<128x96xf32, #tpu.memory_space<vmem>>, vector<128x96xf32>
    tpu.vector_store %arg5[%c0_5, %c0_6], %6 {strides = array<i32>} : memref<128x96xf32, #tpu.memory_space<vmem>>, vector<128x96xf32>,
    return
  }
  func.func @transform_0(%arg0: i32, %arg1: i32) -> (i32, i32) {
    %c0_i32 = arith.constant 0 : i32
    %c0_i32_0 = arith.constant 0 : i32
    return %arg0, %c0_i32 : i32, i32
  }
  func.func @transform_1(%arg0: i32, %arg1: i32) -> (i32, i32) {
    %c0_i32 = arith.constant 0 : i32
    %c0_i32_0 = arith.constant 0 : i32
    return %c0_i32, %arg1 : i32, i32
  }
  func.func @transform_2(%arg0: i32, %arg1: i32) -> (i32, i32) {
    %c0_i32 = arith.constant 0 : i32
    %c0_i32_0 = arith.constant 0 : i32
    return %c0_i32, %arg1 : i32, i32
  }
  func.func @transform_3(%arg0: i32, %arg1: i32) -> (i32, i32) {
    %c0_i32 = arith.constant 0 : i32
    return %arg0, %arg1 : i32, i32
  }
}

module attributes {stable_mosaic.version = 11 : i64} {
  func.func @_linear_bias_kernel(%arg0: i32, %arg1: i32, %arg2: memref<128x32xf32, #tpu.memory_space<vmem>>, %arg3: memref<32x96xbf16, #tpu.memory_space<vmem>>, %arg4: memref<1x96xf32, #tpu.memory_space<vmem>>, %arg5: memref<128x96xf32, #tpu.memory_space<vmem>>) attributes {dimension_semantics = [#tpu.dimension_semantics<parallel>, #tpu.dimension_semantics<parallel>], iteration_bounds = array<i64: 1, 1>, scalar_prefetch = 0 : i64, scratch_operands = 0 : i64, tpu.core_type = #tpu.core_type<tc>, window_params = [{transform_indices = @transform_0, window_bounds = array<i64: 128, 32>}, {transform_indices = @transform_1, window_bounds = array<i64: 32, 96>}, {transform_indices = @transform_2, window_bounds = array<i64: 1, 96>}, {transform_indices = @transform_3, window_bounds = array<i64: 128, 96>}]} {
    %c0 = arith.constant 0 : index
    %c0_0 = arith.constant 0 : index
    %0 = vector.load %arg2[%c0, %c0_0] : memref<128x32xf32, #tpu.memory_space<vmem>>, vector<128x32xf32>
    %1 = arith.truncf %0 : vector<128x32xf32> to vector<128x32xbf16>
    %c0_1 = arith.constant 0 : index
    %c0_2 = arith.constant 0 : index
    %2 = vector.load %arg3[%c0_1, %c0_2] : memref<32x96xbf16, #tpu.memory_space<vmem>>, vector<32x96xbf16>
    %cst = arith.constant dense<0.000000e+00> : vector<128x96xf32>
    %3 = tpu.matmul %1, %2, %cst {dimension_numbers = #tpu.dot_dimension_numbers<[1], [0], [0], [1], [0, 0, 1, 1], [], []>} : vector<128x32xbf16>, vector<32x96xbf16>, vector<128x96xf32> -> vector<128x96xf32>
    %c0_3 = arith.constant 0 : index
    %c0_4 = arith.constant 0 : index
    %4 = vector.load %arg4[%c0_3, %c0_4] : memref<1x96xf32, #tpu.memory_space<vmem>>, vector<1x96xf32>
    %5 = vector.broadcast %4 : vector<1x96xf32> to vector<128x96xf32>
    %6 = arith.addf %3, %5 : vector<128x96xf32>
    %c0_5 = arith.constant 0 : index
    %c0_6 = arith.constant 0 : index
    %7 = vector.load %arg5[%c0_5, %c0_6] : memref<128x96xf32, #tpu.memory_space<vmem>>, vector<128x96xf32>
    tpu.vector_store %arg5[%c0_5, %c0_6], %6 {strides = array<i32>} : memref<128x96xf32, #tpu.memory_space<vmem>>, vector<128x96xf32>,
    return
  }
  func.func @transform_0(%arg0: i32, %arg1: i32) -> (i32, i32) {
    %c0_i32 = arith.constant 0 : i32
    %c0_i32_0 = arith.constant 0 : i32
    return %arg0, %c0_i32 : i32, i32
  }
  func.func @transform_1(%arg0: i32, %arg1: i32) -> (i32, i32) {
    %c0_i32 = arith.constant 0 : i32
    %c0_i32_0 = arith.constant 0 : i32
    return %c0_i32, %arg1 : i32, i32
  }
  func.func @transform_2(%arg0: i32, %arg1: i32) -> (i32, i32) {
    %c0_i32 = arith.constant 0 : i32
    %c0_i32_0 = arith.constant 0 : i32
    return %c0_i32, %arg1 : i32, i32
  }
  func.func @transform_3(%arg0: i32, %arg1: i32) -> (i32, i32) {
    %c0_i32 = arith.constant 0 : i32
    return %arg0, %arg1 : i32, i32
  }
}

</mosaic_0001>

<llo_original>
// kernel: tpu_custom_call.1
$region0: #{tpu_custom_call.1}
  #allocation0 [shape = 'u32[]', space=smem, size = 0x4, offset = 0x4, fixed_abs, tag = 'smem constant byte address 0x4 - core index']
  #allocation1 [shape = 'u32[144,128]{1,0:T(1,128)}', space=vmem, size = 0x12000, scoped, tag = 'internal scratch']
  %s0 = inlined_call_operand.vmem [shape: f32[128,32], index: 0, kind: input, shape index: {}]
  %s1 = inlined_call_operand.vmem [shape: bf16[32,96], index: 1, kind: input, shape index: {}]
  %s2 = inlined_call_operand.vmem [shape: f32[1,96], index: 2, kind: input, shape index: {}]
  %s3 = inlined_call_operand.vmem [shape: f32[128,96], index: 3, kind: output, shape index: {}]
  %s4 = sld [smem:[#allocation0]]
  $region22: #{tpu_custom_call.1} parent=0
    _
  %s6 = ssub.s32 1, %s4
  %s7 = scalar_select 0, %s6, %s4
  // Predicated region
  $region2: #{tpu_custom_call.1} parent=0 // pred_check
    _
  $region3: #{tpu_custom_call.1} parent=0 // pred_check_branch
    %9 = sbr.rel (0) target = $region5
  $region4: #{tpu_custom_call.1} parent=0 // pred_region
    _
  $region5: #{tpu_custom_call.1} parent=0 // pred_fallthru
    _
  // Predicated region
  $region6: #{tpu_custom_call.1} parent=0 // pred_check
    _
  $region7: #{tpu_custom_call.1} parent=0 // pred_check_branch
    %11 = sbr.rel (0) target = $region9
  $region8: #{tpu_custom_call.1} parent=0 // pred_region
    _
  $region9: #{tpu_custom_call.1} parent=0 // pred_fallthru
    _
  // Predicated region
  $region10: #{tpu_custom_call.1} parent=0 // pred_check
    _
  $region11: #{tpu_custom_call.1} parent=0 // pred_check_branch
    %13 = sbr.rel (0) target = $region13
  $region12: #{tpu_custom_call.1} parent=0 // pred_region
    _
  $region13: #{tpu_custom_call.1} parent=0 // pred_fallthru
    _
  %v15 = vld [vmem:[%s0] sm:$0xff]
  %v16 = vld [vmem:[%s0 + $0x8] sm:$0xff]
  %v17 = vld [vmem:[%s0 + $0x10] sm:$0xff]
  %v18 = vld [vmem:[%s0 + $0x18] sm:$0xff]
  %v19 = vld [vmem:[%s0 + $0x20] sm:$0xff]
  %v20 = vld [vmem:[%s0 + $0x28] sm:$0xff]
  %v21 = vld [vmem:[%s0 + $0x30] sm:$0xff]
  %v22 = vld [vmem:[%s0 + $0x38] sm:$0xff]
  %v23 = vld [vmem:[%s0 + $0x40] sm:$0xff]
  %v24 = vld [vmem:[%s0 + $0x48] sm:$0xff]
  %v25 = vld [vmem:[%s0 + $0x50] sm:$0xff]
  %v26 = vld [vmem:[%s0 + $0x58] sm:$0xff]
  %v27 = vld [vmem:[%s0 + $0x60] sm:$0xff]
  %v28 = vld [vmem:[%s0 + $0x68] sm:$0xff]
  %v29 = vld [vmem:[%s0 + $0x70] sm:$0xff]
  %v30 = vld [vmem:[%s0 + $0x78] sm:$0xff]
  %v31 = vpack.c.bf16 %v16, %v15
  %v32 = vpack.c.bf16 %v18, %v17
  %v33 = vpack.c.bf16 %v20, %v19
  %v34 = vpack.c.bf16 %v22, %v21
  %v35 = vpack.c.bf16 %v24, %v23
  %v36 = vpack.c.bf16 %v26, %v25
  %v37 = vpack.c.bf16 %v28, %v27
  %v38 = vpack.c.bf16 %v30, %v29
  %v39 = vld [vmem:[%s1] sm:$0xf]
  %v40 = vld [vmem:[%s1 + $0x4] sm:$0xf]
  %v41 = vld [vmem:[%s1 + $0x8] sm:$0xf]
  %v42 = vld [vmem:[%s1 + $0xc] sm:$0xf]
  %v43 = vld [vmem:[%s2] sm:$0x1]
  %v45 = vlaneseq
  %v46 = vshrl.u32 %v45, 7
  %v47 = vsub.s32 0, %v46
  %v48 = vrot.slane %v43, %v47
  %v54 = vunpack.c.l.b16 %v39
  %v55 = vunpack.c.l.b16 %v40
  %v56 = vunpack.c.l.b16 %v41
  %v57 = vunpack.c.l.b16 %v42
  %v58 = vpack.c.b16 %v55, %v54
  %v59 = vpack.c.b16 %v57, %v56
  %vm62 = vcmask 261120
  %v64 = vsel %vm62, %v31, 0
  %v67 = vsel %vm62, %v32, 0
  %v70 = vsel %vm62, %v33, 0
  %v73 = vsel %vm62, %v34, 0
  %v76 = vsel %vm62, %v35, 0
  %v79 = vsel %vm62, %v36, 0
  %v82 = vsel %vm62, %v37, 0
  %v85 = vsel %vm62, %v38, 0
  %87 = vmatprep.subr.bf16.mxu0 0
  %88 = vmatpush1.bf16.msra.mxu0 0
  %89 = vmatprep.subr.bf16.mxu0 0
  %90 = vmatpush1.bf16.msra.mxu0 0
  %91 = vmatprep.subr.bf16.mxu0 0
  %92 = vmatpush1.bf16.msra.mxu0 0
  %93 = vmatprep.subr.bf16.mxu0 0
  %94 = vmatpush1.bf16.msra.mxu0 0
  %95 = vmatprep.subr.bf16.mxu0 0
  %96 = vmatpush1.bf16.msra.mxu0 0
  %97 = vmatprep.subr.bf16.mxu0 0
  %98 = vmatpush1.bf16.msra.mxu0 0
  %99 = vmatprep.subr.bf16.mxu0 0
  %100 = vmatpush1.bf16.msra.mxu0 %v59
  %101 = vmatprep.subr.bf16.mxu0 0
  %102 = vmatpush1.bf16.msra.mxu0 %v58
  %103 = vmatprep.subr.bf16.mxu0 0
  %104 = vmatpush2.bf16.msra.mxu0 0
  %105 = vmatprep.subr.bf16.mxu0 0
  %106 = vmatpush2.bf16.msra.mxu0 0
  %107 = vmatprep.subr.bf16.mxu0 0
  %108 = vmatpush2.bf16.msra.mxu0 0
  %109 = vmatprep.subr.bf16.mxu0 0
  %110 = vmatpush2.bf16.msra.mxu0 0
  %111 = vmatprep.subr.bf16.mxu0 0
  %112 = vmatpush2.bf16.msra.mxu0 0
  %113 = vmatprep.subr.bf16.mxu0 0
  %114 = vmatpush2.bf16.msra.mxu0 0
  %115 = vmatprep.subr.bf16.mxu0 0
  %116 = vmatpush2.bf16.msra.mxu0 0
  %117 = vmatprep.subr.bf16.mxu0 0
  %118 = vmatpush2.bf16.msra.mxu0 0
  %119 = vmatprep.mubr.bf16.mxu0 0
  %120 = vmatmul.mubr.bf16.gmra.mxu0 %v64
  %v121 = vpop.f32.mrf.mxu0
  %v122 = vadd.f32 %v48, %v121
  %v123 = vpop.f32.mrf.mxu0
  %v124 = vpop.f32.mrf.mxu0
  %v125 = vadd.f32 %v48, %v124
  %v126 = vpop.f32.mrf.mxu0
  %127 = vmatprep.mubr.bf16.mxu0 0
  %128 = vmatmul.mubr.bf16.gmra.mxu0 %v67
  %v129 = vpop.f32.mrf.mxu0
  %v130 = vadd.f32 %v48, %v129
  %v131 = vpop.f32.mrf.mxu0
  %v132 = vpop.f32.mrf.mxu0
  %v133 = vadd.f32 %v48, %v132
  %v134 = vpop.f32.mrf.mxu0
  %135 = vmatprep.mubr.bf16.mxu0 0
  %136 = vmatmul.mubr.bf16.gmra.mxu0 %v70
  %v137 = vpop.f32.mrf.mxu0
  %v138 = vadd.f32 %v48, %v137
  %v139 = vpop.f32.mrf.mxu0
  %v140 = vpop.f32.mrf.mxu0
  %v141 = vadd.f32 %v48, %v140
  %v142 = vpop.f32.mrf.mxu0
  %143 = vmatprep.mubr.bf16.mxu0 0
  %144 = vmatmul.mubr.bf16.gmra.mxu0 %v73
  %v145 = vpop.f32.mrf.mxu0
  %v146 = vadd.f32 %v48, %v145
  %v147 = vpop.f32.mrf.mxu0
  %v148 = vpop.f32.mrf.mxu0
  %v149 = vadd.f32 %v48, %v148
  %v150 = vpop.f32.mrf.mxu0
  %151 = vmatprep.mubr.bf16.mxu0 0
  %152 = vmatmul.mubr.bf16.gmra.mxu0 %v76
  %v153 = vpop.f32.mrf.mxu0
  %v154 = vadd.f32 %v48, %v153
  %v155 = vpop.f32.mrf.mxu0
  %v156 = vpop.f32.mrf.mxu0
  %v157 = vadd.f32 %v48, %v156
  %v158 = vpop.f32.mrf.mxu0
  %159 = vmatprep.mubr.bf16.mxu0 0
  %160 = vmatmul.mubr.bf16.gmra.mxu0 %v79
  %v161 = vpop.f32.mrf.mxu0
  %v162 = vadd.f32 %v48, %v161
  %v163 = vpop.f32.mrf.mxu0
  %v164 = vpop.f32.mrf.mxu0
  %v165 = vadd.f32 %v48, %v164
  %v166 = vpop.f32.mrf.mxu0
  %167 = vmatprep.mubr.bf16.mxu0 0
  %168 = vmatmul.mubr.bf16.gmra.mxu0 %v82
  %v169 = vpop.f32.mrf.mxu0
  %v170 = vadd.f32 %v48, %v169
  %v171 = vpop.f32.mrf.mxu0
  %v172 = vpop.f32.mrf.mxu0
  %v173 = vadd.f32 %v48, %v172
  %v174 = vpop.f32.mrf.mxu0
  %175 = vmatprep.mubr.bf16.mxu0 0
  %176 = vmatmul.mubr.bf16.gmra.mxu0 %v85
  %v177 = vpop.f32.mrf.mxu0
  %v178 = vadd.f32 %v48, %v177
  %v179 = vpop.f32.mrf.mxu0
  %v180 = vpop.f32.mrf.mxu0
  %v181 = vadd.f32 %v48, %v180
  %v182 = vpop.f32.mrf.mxu0
  %183 = vdwg.mxu0
  %vm184 = vcmask 785408
  %185 = vst.msk [vmem:[%s3] sm:$0xff] %vm184, %v122
  %186 = vst.msk [vmem:[%s3 + $0x8] sm:$0xff] %vm184, %v125
  %187 = vst.msk [vmem:[%s3 + $0x10] sm:$0xff] %vm184, %v130
  %188 = vst.msk [vmem:[%s3 + $0x18] sm:$0xff] %vm184, %v133
  %189 = vst.msk [vmem:[%s3 + $0x20] sm:$0xff] %vm184, %v138
  %190 = vst.msk [vmem:[%s3 + $0x28] sm:$0xff] %vm184, %v141
  %191 = vst.msk [vmem:[%s3 + $0x30] sm:$0xff] %vm184, %v146
  %192 = vst.msk [vmem:[%s3 + $0x38] sm:$0xff] %vm184, %v149
  %193 = vst.msk [vmem:[%s3 + $0x40] sm:$0xff] %vm184, %v154
  %194 = vst.msk [vmem:[%s3 + $0x48] sm:$0xff] %vm184, %v157
  %195 = vst.msk [vmem:[%s3 + $0x50] sm:$0xff] %vm184, %v162
  %196 = vst.msk [vmem:[%s3 + $0x58] sm:$0xff] %vm184, %v165
  %197 = vst.msk [vmem:[%s3 + $0x60] sm:$0xff] %vm184, %v170
  %198 = vst.msk [vmem:[%s3 + $0x68] sm:$0xff] %vm184, %v173
  %199 = vst.msk [vmem:[%s3 + $0x70] sm:$0xff] %vm184, %v178
  %200 = vst.msk [vmem:[%s3 + $0x78] sm:$0xff] %vm184, %v181
  // Predicated region
  $region14: #{tpu_custom_call.1} parent=0 // pred_check
    _
  $region15: #{tpu_custom_call.1} parent=0 // pred_check_branch
    %202 = sbr.rel (0) target = $region17
  $region16: #{tpu_custom_call.1} parent=0 // pred_region
    _
  $region17: #{tpu_custom_call.1} parent=0 // pred_fallthru
    _
  // Predicated region
  $region18: #{tpu_custom_call.1} parent=0 // pred_check
    _
  $region19: #{tpu_custom_call.1} parent=0 // pred_check_branch
    %204 = sbr.rel (0) target = $region21
  $region20: #{tpu_custom_call.1} parent=0 // pred_region
    _
  $region21: #{tpu_custom_call.1} parent=0 // pred_fallthru
    _

// kernel: tpu_custom_call.1
$region0: #{tpu_custom_call.1}
  #allocation0 [shape = 'u32[]', space=smem, size = 0x4, offset = 0x4, fixed_abs, tag = 'smem constant byte address 0x4 - core index']
  #allocation1 [shape = 'u32[144,128]{1,0:T(1,128)}', space=vmem, size = 0x12000, scoped, tag = 'internal scratch']
  %s0 = inlined_call_operand.vmem [shape: f32[128,32], index: 0, kind: input, shape index: {}]
  %s1 = inlined_call_operand.vmem [shape: bf16[32,96], index: 1, kind: input, shape index: {}]
  %s2 = inlined_call_operand.vmem [shape: f32[1,96], index: 2, kind: input, shape index: {}]
  %s3 = inlined_call_operand.vmem [shape: f32[128,96], index: 3, kind: output, shape index: {}]
  %s4 = sld [smem:[#allocation0]]
  $region22: #{tpu_custom_call.1} parent=0
    _
  %s6 = ssub.s32 1, %s4
  %s7 = scalar_select 0, %s6, %s4
  // Predicated region
  $region2: #{tpu_custom_call.1} parent=0 // pred_check
    _
  $region3: #{tpu_custom_call.1} parent=0 // pred_check_branch
    %9 = sbr.rel (0) target = $region5
  $region4: #{tpu_custom_call.1} parent=0 // pred_region
    _
  $region5: #{tpu_custom_call.1} parent=0 // pred_fallthru
    _
  // Predicated region
  $region6: #{tpu_custom_call.1} parent=0 // pred_check
    _
  $region7: #{tpu_custom_call.1} parent=0 // pred_check_branch
    %11 = sbr.rel (0) target = $region9
  $region8: #{tpu_custom_call.1} parent=0 // pred_region
    _
  $region9: #{tpu_custom_call.1} parent=0 // pred_fallthru
    _
  // Predicated region
  $region10: #{tpu_custom_call.1} parent=0 // pred_check
    _
  $region11: #{tpu_custom_call.1} parent=0 // pred_check_branch
    %13 = sbr.rel (0) target = $region13
  $region12: #{tpu_custom_call.1} parent=0 // pred_region
    _
  $region13: #{tpu_custom_call.1} parent=0 // pred_fallthru
    _
  %v15 = vld [vmem:[%s0] sm:$0xff]
  %v16 = vld [vmem:[%s0 + $0x8] sm:$0xff]
  %v17 = vld [vmem:[%s0 + $0x10] sm:$0xff]
  %v18 = vld [vmem:[%s0 + $0x18] sm:$0xff]
  %v19 = vld [vmem:[%s0 + $0x20] sm:$0xff]
  %v20 = vld [vmem:[%s0 + $0x28] sm:$0xff]
  %v21 = vld [vmem:[%s0 + $0x30] sm:$0xff]
  %v22 = vld [vmem:[%s0 + $0x38] sm:$0xff]
  %v23 = vld [vmem:[%s0 + $0x40] sm:$0xff]
  %v24 = vld [vmem:[%s0 + $0x48] sm:$0xff]
  %v25 = vld [vmem:[%s0 + $0x50] sm:$0xff]
  %v26 = vld [vmem:[%s0 + $0x58] sm:$0xff]
  %v27 = vld [vmem:[%s0 + $0x60] sm:$0xff]
  %v28 = vld [vmem:[%s0 + $0x68] sm:$0xff]
  %v29 = vld [vmem:[%s0 + $0x70] sm:$0xff]
  %v30 = vld [vmem:[%s0 + $0x78] sm:$0xff]
  %v31 = vpack.c.bf16 %v16, %v15
  %v32 = vpack.c.bf16 %v18, %v17
  %v33 = vpack.c.bf16 %v20, %v19
  %v34 = vpack.c.bf16 %v22, %v21
  %v35 = vpack.c.bf16 %v24, %v23
  %v36 = vpack.c.bf16 %v26, %v25
  %v37 = vpack.c.bf16 %v28, %v27
  %v38 = vpack.c.bf16 %v30, %v29
  %v39 = vld [vmem:[%s1] sm:$0xf]
  %v40 = vld [vmem:[%s1 + $0x4] sm:$0xf]
  %v41 = vld [vmem:[%s1 + $0x8] sm:$0xf]
  %v42 = vld [vmem:[%s1 + $0xc] sm:$0xf]
  %v43 = vld [vmem:[%s2] sm:$0x1]
  %v45 = vlaneseq
  %v46 = vshrl.u32 %v45, 7
  %v47 = vsub.s32 0, %v46
  %v48 = vrot.slane %v43, %v47
  %v54 = vunpack.c.l.b16 %v39
  %v55 = vunpack.c.l.b16 %v40
  %v56 = vunpack.c.l.b16 %v41
  %v57 = vunpack.c.l.b16 %v42
  %v58 = vpack.c.b16 %v55, %v54
  %v59 = vpack.c.b16 %v57, %v56
  %vm62 = vcmask 261120
  %v64 = vsel %vm62, %v31, 0
  %v67 = vsel %vm62, %v32, 0
  %v70 = vsel %vm62, %v33, 0
  %v73 = vsel %vm62, %v34, 0
  %v76 = vsel %vm62, %v35, 0
  %v79 = vsel %vm62, %v36, 0
  %v82 = vsel %vm62, %v37, 0
  %v85 = vsel %vm62, %v38, 0
  %87 = vmatprep.subr.bf16.mxu0 0
  %88 = vmatpush1.bf16.msra.mxu0 0
  %89 = vmatprep.subr.bf16.mxu0 0
  %90 = vmatpush1.bf16.msra.mxu0 0
  %91 = vmatprep.subr.bf16.mxu0 0
  %92 = vmatpush1.bf16.msra.mxu0 0
  %93 = vmatprep.subr.bf16.mxu0 0
  %94 = vmatpush1.bf16.msra.mxu0 0
  %95 = vmatprep.subr.bf16.mxu0 0
  %96 = vmatpush1.bf16.msra.mxu0 0
  %97 = vmatprep.subr.bf16.mxu0 0
  %98 = vmatpush1.bf16.msra.mxu0 0
  %99 = vmatprep.subr.bf16.mxu0 0
  %100 = vmatpush1.bf16.msra.mxu0 %v59
  %101 = vmatprep.subr.bf16.mxu0 0
  %102 = vmatpush1.bf16.msra.mxu0 %v58
  %103 = vmatprep.subr.bf16.mxu0 0
  %104 = vmatpush2.bf16.msra.mxu0 0
  %105 = vmatprep.subr.bf16.mxu0 0
  %106 = vmatpush2.bf16.msra.mxu0 0
  %107 = vmatprep.subr.bf16.mxu0 0
  %108 = vmatpush2.bf16.msra.mxu0 0
  %109 = vmatprep.subr.bf16.mxu0 0
  %110 = vmatpush2.bf16.msra.mxu0 0
  %111 = vmatprep.subr.bf16.mxu0 0
  %112 = vmatpush2.bf16.msra.mxu0 0
  %113 = vmatprep.subr.bf16.mxu0 0
  %114 = vmatpush2.bf16.msra.mxu0 0
  %115 = vmatprep.subr.bf16.mxu0 0
  %116 = vmatpush2.bf16.msra.mxu0 0
  %117 = vmatprep.subr.bf16.mxu0 0
  %118 = vmatpush2.bf16.msra.mxu0 0
  %119 = vmatprep.mubr.bf16.mxu0 0
  %120 = vmatmul.mubr.bf16.gmra.mxu0 %v64
  %v121 = vpop.f32.mrf.mxu0
  %v122 = vadd.f32 %v48, %v121
  %v123 = vpop.f32.mrf.mxu0
  %v124 = vpop.f32.mrf.mxu0
  %v125 = vadd.f32 %v48, %v124
  %v126 = vpop.f32.mrf.mxu0
  %127 = vmatprep.mubr.bf16.mxu0 0
  %128 = vmatmul.mubr.bf16.gmra.mxu0 %v67
  %v129 = vpop.f32.mrf.mxu0
  %v130 = vadd.f32 %v48, %v129
  %v131 = vpop.f32.mrf.mxu0
  %v132 = vpop.f32.mrf.mxu0
  %v133 = vadd.f32 %v48, %v132
  %v134 = vpop.f32.mrf.mxu0
  %135 = vmatprep.mubr.bf16.mxu0 0
  %136 = vmatmul.mubr.bf16.gmra.mxu0 %v70
  %v137 = vpop.f32.mrf.mxu0
  %v138 = vadd.f32 %v48, %v137
  %v139 = vpop.f32.mrf.mxu0
  %v140 = vpop.f32.mrf.mxu0
  %v141 = vadd.f32 %v48, %v140
  %v142 = vpop.f32.mrf.mxu0
  %143 = vmatprep.mubr.bf16.mxu0 0
  %144 = vmatmul.mubr.bf16.gmra.mxu0 %v73
  %v145 = vpop.f32.mrf.mxu0
  %v146 = vadd.f32 %v48, %v145
  %v147 = vpop.f32.mrf.mxu0
  %v148 = vpop.f32.mrf.mxu0
  %v149 = vadd.f32 %v48, %v148
  %v150 = vpop.f32.mrf.mxu0
  %151 = vmatprep.mubr.bf16.mxu0 0
  %152 = vmatmul.mubr.bf16.gmra.mxu0 %v76
  %v153 = vpop.f32.mrf.mxu0
  %v154 = vadd.f32 %v48, %v153
  %v155 = vpop.f32.mrf.mxu0
  %v156 = vpop.f32.mrf.mxu0
  %v157 = vadd.f32 %v48, %v156
  %v158 = vpop.f32.mrf.mxu0
  %159 = vmatprep.mubr.bf16.mxu0 0
  %160 = vmatmul.mubr.bf16.gmra.mxu0 %v79
  %v161 = vpop.f32.mrf.mxu0
  %v162 = vadd.f32 %v48, %v161
  %v163 = vpop.f32.mrf.mxu0
  %v164 = vpop.f32.mrf.mxu0
  %v165 = vadd.f32 %v48, %v164
  %v166 = vpop.f32.mrf.mxu0
  %167 = vmatprep.mubr.bf16.mxu0 0
  %168 = vmatmul.mubr.bf16.gmra.mxu0 %v82
  %v169 = vpop.f32.mrf.mxu0
  %v170 = vadd.f32 %v48, %v169
  %v171 = vpop.f32.mrf.mxu0
  %v172 = vpop.f32.mrf.mxu0
  %v173 = vadd.f32 %v48, %v172
  %v174 = vpop.f32.mrf.mxu0
  %175 = vmatprep.mubr.bf16.mxu0 0
  %176 = vmatmul.mubr.bf16.gmra.mxu0 %v85
  %v177 = vpop.f32.mrf.mxu0
  %v178 = vadd.f32 %v48, %v177
  %v179 = vpop.f32.mrf.mxu0
  %v180 = vpop.f32.mrf.mxu0
  %v181 = vadd.f32 %v48, %v180
  %v182 = vpop.f32.mrf.mxu0
  %183 = vdwg.mxu0
  %vm184 = vcmask 785408
  %185 = vst.msk [vmem:[%s3] sm:$0xff] %vm184, %v122
  %186 = vst.msk [vmem:[%s3 + $0x8] sm:$0xff] %vm184, %v125
  %187 = vst.msk [vmem:[%s3 + $0x10] sm:$0xff] %vm184, %v130
  %188 = vst.msk [vmem:[%s3 + $0x18] sm:$0xff] %vm184, %v133
  %189 = vst.msk [vmem:[%s3 + $0x20] sm:$0xff] %vm184, %v138
  %190 = vst.msk [vmem:[%s3 + $0x28] sm:$0xff] %vm184, %v141
  %191 = vst.msk [vmem:[%s3 + $0x30] sm:$0xff] %vm184, %v146
  %192 = vst.msk [vmem:[%s3 + $0x38] sm:$0xff] %vm184, %v149
  %193 = vst.msk [vmem:[%s3 + $0x40] sm:$0xff] %vm184, %v154
  %194 = vst.msk [vmem:[%s3 + $0x48] sm:$0xff] %vm184, %v157
  %195 = vst.msk [vmem:[%s3 + $0x50] sm:$0xff] %vm184, %v162
  %196 = vst.msk [vmem:[%s3 + $0x58] sm:$0xff] %vm184, %v165
  %197 = vst.msk [vmem:[%s3 + $0x60] sm:$0xff] %vm184, %v170
  %198 = vst.msk [vmem:[%s3 + $0x68] sm:$0xff] %vm184, %v173
  %199 = vst.msk [vmem:[%s3 + $0x70] sm:$0xff] %vm184, %v178
  %200 = vst.msk [vmem:[%s3 + $0x78] sm:$0xff] %vm184, %v181
  // Predicated region
  $region14: #{tpu_custom_call.1} parent=0 // pred_check
    _
  $region15: #{tpu_custom_call.1} parent=0 // pred_check_branch
    %202 = sbr.rel (0) target = $region17
  $region16: #{tpu_custom_call.1} parent=0 // pred_region
    _
  $region17: #{tpu_custom_call.1} parent=0 // pred_fallthru
    _
  // Predicated region
  $region18: #{tpu_custom_call.1} parent=0 // pred_check
    _
  $region19: #{tpu_custom_call.1} parent=0 // pred_check_branch
    %204 = sbr.rel (0) target = $region21
  $region20: #{tpu_custom_call.1} parent=0 // pred_region
    _
  $region21: #{tpu_custom_call.1} parent=0 // pred_fallthru
    _

</llo_original>
